<compile_context>
chip_gen: v5e
topology: v5e:2x2
jax: 0.10.0
libtpu: 0.0.40
codegen_flags: <defaults>
</compile_context>

<pallas_src>
import math

import jax
import jax.numpy as jnp
from jax.experimental import pallas as pl
from jax.experimental.pallas import tpu as pltpu


def mlp_kernel(x_ref, w1_ref, b1_ref, w2_ref, b2_ref, o_ref, acc_ref):
    # x_ref  : (tm, H)  compute dtype  token tile
    # w1_ref : (H, tk)  compute dtype  fc1 weight chunk (stored in x out)
    # b1_ref : (1, tk)  f32            fc1 bias chunk
    # w2_ref : (tk, H)  compute dtype  fc2 weight chunk
    # b2_ref : (1, H)   f32            fc2 bias
    # o_ref  : (tm, H)  output dtype
    # acc_ref: (tm, H)  f32 VMEM accumulator, resident across the k axis
    k = pl.program_id(1)

    @pl.when(k == 0)
    def _init():
        acc_ref[...] = jnp.zeros_like(acc_ref)

    # fc1 chunk on the MXU, f32 accumulation
    h = jnp.dot(x_ref[...], w1_ref[...], preferred_element_type=jnp.float32)
    h = h + b1_ref[...]

    # exact (erf-based) GELU in f32, matching torch.nn.functional.gelu default
    h = 0.5 * h * (1.0 + jax.lax.erf(h * jnp.float32(1.0 / math.sqrt(2.0))))

    # dropout: eval-mode identity
    # TODO(synk): training-mode dropout (pltpu.prng_random_bits mask) not wired in.

    # fc2 chunk, accumulate partial products over the streamed MLP dimension
    acc_ref[...] += jnp.dot(
        h.astype(w2_ref.dtype), w2_ref[...], preferred_element_type=jnp.float32
    )

    @pl.when(k == pl.num_programs(1) - 1)
    def _finalize():
        o_ref[...] = (acc_ref[...] + b2_ref[...]).astype(o_ref.dtype)


def mlp_forward(x, w1, b1, w2, b2, *, tm=256, tk=512, compute_dtype=jnp.bfloat16):
    """x: (B, S, H).  w1: (H, M), b1: (M,), w2: (M, H), b2: (H,)."""
    B, S, H = x.shape
    M = w1.shape[1]
    T = B * S

    tm = min(tm, T)
    tk = min(tk, M)
    assert T % tm == 0, "token count must tile evenly by tm"
    assert M % tk == 0, "mlp_dim must tile evenly by tk"
    assert tm == T or tm % 16 == 0, "tm must be sublane-aligned (or the full T)"
    assert tk == M or tk % 128 == 0, "tk must be lane-aligned (or the full M)"

    cd = jnp.dtype(compute_dtype)
    x2d = x.reshape(T, H).astype(cd)
    w1c = w1.astype(cd)
    w2c = w2.astype(cd)
    b1_2d = b1.reshape(1, M).astype(jnp.float32)
    b2_2d = b2.reshape(1, H).astype(jnp.float32)

    # VMEM budget: double-buffered input/output tiles + f32 accumulator scratch.
    cd_bytes = cd.itemsize
    out_bytes = jnp.dtype(x.dtype).itemsize
    tile_bytes = (
        2 * tm * H * cd_bytes                 # x tile
        + 2 * (H * tk + tk * H) * cd_bytes    # w1 / w2 chunks
        + 2 * (tk + H) * 4                    # biases
        + 2 * tm * H * out_bytes              # output tile
        + tm * H * 4                          # accumulator scratch
    )
    vmem_limit = int(min(max(2 * tile_bytes, 32 * 1024 * 1024), 64 * 1024 * 1024))

    out2d = pl.pallas_call(
        mlp_kernel,
        out_shape=jax.ShapeDtypeStruct((T, H), x.dtype),
        grid=(T // tm, M // tk),
        in_specs=[
            pl.BlockSpec((tm, H), lambda i, k: (i, 0)),   # x token tile
            pl.BlockSpec((H, tk), lambda i, k: (0, k)),   # fc1 weight chunk
            pl.BlockSpec((1, tk), lambda i, k: (0, k)),   # fc1 bias chunk
            pl.BlockSpec((tk, H), lambda i, k: (k, 0)),   # fc2 weight chunk
            pl.BlockSpec((1, H), lambda i, k: (0, 0)),    # fc2 bias
        ],
        out_specs=pl.BlockSpec((tm, H), lambda i, k: (i, 0)),
        scratch_shapes=[pltpu.VMEM((tm, H), jnp.float32)],
        compiler_params=pltpu.CompilerParams(
            dimension_semantics=("parallel", "arbitrary"),
            vmem_limit_bytes=vmem_limit,
        ),
    )(x2d, w1c, b1_2d, w2c, b2_2d)

    return out2d.reshape(B, S, H)


def mlp_reference(x, w1, b1, w2, b2, compute_dtype=jnp.bfloat16):
    """Plain-JAX reference with the same bf16-matmul / f32-accumulate numerics."""
    cd = jnp.dtype(compute_dtype)
    B, S, H = x.shape
    x2 = x.reshape(-1, H).astype(cd)
    h = jnp.dot(x2, w1.astype(cd), preferred_element_type=jnp.float32)
    h = h + b1.astype(jnp.float32)
    h = 0.5 * h * (1.0 + jax.lax.erf(h * jnp.float32(1.0 / math.sqrt(2.0))))
    o = jnp.dot(h.astype(cd), w2.astype(cd), preferred_element_type=jnp.float32)
    o = o + b2.astype(jnp.float32)
    return o.astype(x.dtype).reshape(B, S, H)


def init_params(key, hidden_size, mlp_dim):
    """Deterministic init mirroring Mlp._init_weights (xavier uniform + tiny normal bias)."""
    k1, k2, k3, k4 = jax.random.split(key, 4)
    bound1 = math.sqrt(6.0 / (hidden_size + mlp_dim))
    bound2 = math.sqrt(6.0 / (mlp_dim + hidden_size))
    # stored directly as (in, out) so the kernel computes x @ W
    w1 = jax.random.uniform(k1, (hidden_size, mlp_dim), jnp.float32, -bound1, bound1)
    w2 = jax.random.uniform(k2, (mlp_dim, hidden_size), jnp.float32, -bound2, bound2)
    b1 = 1e-6 * jax.random.normal(k3, (mlp_dim,), jnp.float32)
    b2 = 1e-6 * jax.random.normal(k4, (hidden_size,), jnp.float32)
    return w1, b1, w2, b2


if __name__ == "__main__":
    B, S, H, M = 2, 8, 32, 64  # batch, seq, hidden_size, mlp_dim

    key = jax.random.PRNGKey(0)
    kx, kp = jax.random.split(key)
    x = jax.random.normal(kx, (B, S, H), jnp.float32)
    w1, b1, w2, b2 = init_params(kp, H, M)

    out = mlp_forward(x, w1, b1, w2, b2)
    jax.block_until_ready(out)

    ref = mlp_reference(x, w1, b1, w2, b2)
    assert out.shape == (B, S, H)
    assert jnp.allclose(out, ref, atol=1e-2, rtol=1e-2), (
        "mismatch vs reference, max err = %g" % float(jnp.max(jnp.abs(out - ref)))
    )

    print("KERNEL_OK")
</pallas_src>

<mosaic_0001>
module attributes {stable_mosaic.version = 11 : i64} {
  func.func @mlp_kernel(%arg0: i32, %arg1: i32, %arg2: memref<16x32xbf16, #tpu.memory_space<vmem>>, %arg3: memref<32x64xbf16, #tpu.memory_space<vmem>>, %arg4: memref<1x64xf32, #tpu.memory_space<vmem>>, %arg5: memref<64x32xbf16, #tpu.memory_space<vmem>>, %arg6: memref<1x32xf32, #tpu.memory_space<vmem>>, %arg7: memref<16x32xf32, #tpu.memory_space<vmem>>, %arg8: memref<16x32xf32, #tpu.memory_space<vmem>>) attributes {dimension_semantics = [#tpu.dimension_semantics<parallel>, #tpu.dimension_semantics<arbitrary>], iteration_bounds = array<i64: 1, 1>, scalar_prefetch = 0 : i64, scratch_operands = 1 : i64, tpu.core_type = #tpu.core_type<tc>, window_params = [{transform_indices = @transform_0, window_bounds = array<i64: 16, 32>}, {transform_indices = @transform_1, window_bounds = array<i64: 32, 64>}, {transform_indices = @transform_2, window_bounds = array<i64: 1, 64>}, {transform_indices = @transform_3, window_bounds = array<i64: 64, 32>}, {pipeline_mode = #tpu.pipeline_mode<synchronous>, transform_indices = @transform_4, window_bounds = array<i64: 1, 32>}, {transform_indices = @transform_5, window_bounds = array<i64: 16, 32>}]} {
    %c0_i32 = arith.constant 0 : i32
    %0 = arith.cmpi eq, %arg1, %c0_i32 : i32
    %1 = arith.extui %0 : i1 to i32
    %c0_i32_0 = arith.constant 0 : i32
    %2 = arith.cmpi ne, %1, %c0_i32_0 : i32
    scf.if %2 {
      %cst_18 = arith.constant 0.000000e+00 : f32
      %26 = vector.broadcast %cst_18 : f32 to vector<16x32xf32>
      %c0_19 = arith.constant 0 : index
      %c0_20 = arith.constant 0 : index
      %27 = vector.load %arg8[%c0_19, %c0_20] : memref<16x32xf32, #tpu.memory_space<vmem>>, vector<16x32xf32>
      tpu.vector_store %arg8[%c0_19, %c0_20], %26 {strides = array<i32>} : memref<16x32xf32, #tpu.memory_space<vmem>>, vector<16x32xf32>,
    } else {
    }
    %c0 = arith.constant 0 : index
    %c0_1 = arith.constant 0 : index
    %3 = vector.load %arg2[%c0, %c0_1] : memref<16x32xbf16, #tpu.memory_space<vmem>>, vector<16x32xbf16>
    %c0_2 = arith.constant 0 : index
    %c0_3 = arith.constant 0 : index
    %4 = vector.load %arg3[%c0_2, %c0_3] : memref<32x64xbf16, #tpu.memory_space<vmem>>, vector<32x64xbf16>
    %cst = arith.constant dense<0.000000e+00> : vector<16x64xf32>
    %5 = tpu.matmul %3, %4, %cst {dimension_numbers = #tpu.dot_dimension_numbers<[1], [0], [0], [1], [0, 0, 1, 1], [], []>} : vector<16x32xbf16>, vector<32x64xbf16>, vector<16x64xf32> -> vector<16x64xf32>
    %c0_4 = arith.constant 0 : index
    %c0_5 = arith.constant 0 : index
    %6 = vector.load %arg4[%c0_4, %c0_5] : memref<1x64xf32, #tpu.memory_space<vmem>>, vector<1x64xf32>
    %7 = vector.broadcast %6 : vector<1x64xf32> to vector<16x64xf32>
    %8 = arith.addf %5, %7 : vector<16x64xf32>
    %cst_6 = arith.constant 5.000000e-01 : f32
    %9 = vector.broadcast %cst_6 : f32 to vector<16x64xf32>
    %10 = arith.mulf %9, %8 : vector<16x64xf32>
    %cst_7 = arith.constant 0.707106769 : f32
    %11 = vector.broadcast %cst_7 : f32 to vector<16x64xf32>
    %12 = arith.mulf %8, %11 : vector<16x64xf32>
    %13 = math.erf %12 : vector<16x64xf32>
    %cst_8 = arith.constant 1.000000e+00 : f32
    %14 = vector.broadcast %cst_8 : f32 to vector<16x64xf32>
    %15 = arith.addf %14, %13 : vector<16x64xf32>
    %16 = arith.mulf %10, %15 : vector<16x64xf32>
    %c0_9 = arith.constant 0 : index
    %c0_10 = arith.constant 0 : index
    %17 = vector.load %arg8[%c0_9, %c0_10] : memref<16x32xf32, #tpu.memory_space<vmem>>, vector<16x32xf32>
    %18 = arith.truncf %16 : vector<16x64xf32> to vector<16x64xbf16>
    %c0_11 = arith.constant 0 : index
    %c0_12 = arith.constant 0 : index
    %19 = vector.load %arg5[%c0_11, %c0_12] : memref<64x32xbf16, #tpu.memory_space<vmem>>, vector<64x32xbf16>
    %cst_13 = arith.constant dense<0.000000e+00> : vector<16x32xf32>
    %20 = tpu.matmul %18, %19, %cst_13 {dimension_numbers = #tpu.dot_dimension_numbers<[1], [0], [0], [1], [0, 0, 1, 1], [], []>} : vector<16x64xbf16>, vector<64x32xbf16>, vector<16x32xf32> -> vector<16x32xf32>
    %21 = arith.addf %17, %20 : vector<16x32xf32>
    %c0_14 = arith.constant 0 : index
    %c0_15 = arith.constant 0 : index
    %22 = vector.load %arg8[%c0_14, %c0_15] : memref<16x32xf32, #tpu.memory_space<vmem>>, vector<16x32xf32>
    tpu.vector_store %arg8[%c0_14, %c0_15], %21 {strides = array<i32>} : memref<16x32xf32, #tpu.memory_space<vmem>>, vector<16x32xf32>,
    %c0_i32_16 = arith.constant 0 : i32
    %23 = arith.cmpi eq, %arg1, %c0_i32_16 : i32
    %24 = arith.extui %23 : i1 to i32
    %c0_i32_17 = arith.constant 0 : i32
    %25 = arith.cmpi ne, %24, %c0_i32_17 : i32
    scf.if %25 {
      %c0_18 = arith.constant 0 : index
      %c0_19 = arith.constant 0 : index
      %26 = vector.load %arg8[%c0_18, %c0_19] : memref<16x32xf32, #tpu.memory_space<vmem>>, vector<16x32xf32>
      %c0_20 = arith.constant 0 : index
      %c0_21 = arith.constant 0 : index
      %27 = vector.load %arg6[%c0_20, %c0_21] : memref<1x32xf32, #tpu.memory_space<vmem>>, vector<1x32xf32>
      %28 = vector.broadcast %27 : vector<1x32xf32> to vector<16x32xf32>
      %29 = arith.addf %26, %28 : vector<16x32xf32>
      %c0_22 = arith.constant 0 : index
      %c0_23 = arith.constant 0 : index
      %30 = vector.load %arg7[%c0_22, %c0_23] : memref<16x32xf32, #tpu.memory_space<vmem>>, vector<16x32xf32>
      tpu.vector_store %arg7[%c0_22, %c0_23], %29 {strides = array<i32>} : memref<16x32xf32, #tpu.memory_space<vmem>>, vector<16x32xf32>,
    } else {
    }
    return
  }
  func.func @transform_0(%arg0: i32, %arg1: i32) -> (i32, i32) {
    %c0_i32 = arith.constant 0 : i32
    %c0_i32_0 = arith.constant 0 : i32
    return %arg0, %c0_i32 : i32, i32
  }
  func.func @transform_1(%arg0: i32, %arg1: i32) -> (i32, i32) {
    %c0_i32 = arith.constant 0 : i32
    %c0_i32_0 = arith.constant 0 : i32
    return %c0_i32, %arg1 : i32, i32
  }
  func.func @transform_2(%arg0: i32, %arg1: i32) -> (i32, i32) {
    %c0_i32 = arith.constant 0 : i32
    %c0_i32_0 = arith.constant 0 : i32
    return %c0_i32, %arg1 : i32, i32
  }
  func.func @transform_3(%arg0: i32, %arg1: i32) -> (i32, i32) {
    %c0_i32 = arith.constant 0 : i32
    %c0_i32_0 = arith.constant 0 : i32
    return %arg1, %c0_i32 : i32, i32
  }
  func.func @transform_4(%arg0: i32, %arg1: i32) -> (i32, i32) {
    %c0_i32 = arith.constant 0 : i32
    %c0_i32_0 = arith.constant 0 : i32
    %c0_i32_1 = arith.constant 0 : i32
    return %c0_i32, %c0_i32_0 : i32, i32
  }
  func.func @transform_5(%arg0: i32, %arg1: i32) -> (i32, i32) {
    %c0_i32 = arith.constant 0 : i32
    %c0_i32_0 = arith.constant 0 : i32
    return %arg0, %c0_i32 : i32, i32
  }
}

</mosaic_0001>

<llo_original>
// kernel: tpu_custom_call.1
$region0: #{tpu_custom_call.1}
  #allocation0 [shape = 'u32[]', space=smem, size = 0x4, offset = 0x4, fixed_abs, tag = 'smem constant byte address 0x4 - core index']
  #allocation1 [shape = 'u32[72,128]{1,0:T(1,128)}', space=vmem, size = 0x9000, scoped, tag = 'internal scratch']
  #allocation2 [shape = 'f32[16,32]{1,0:T(8,128)}', space=vmem, size = 0x2000, scoped, tag = 'scratch operand']
  %s0 = inlined_call_operand.vmem [shape: bf16[16,32], index: 0, kind: input, shape index: {}]
  %s1 = inlined_call_operand.vmem [shape: bf16[32,64], index: 1, kind: input, shape index: {}]
  %s2 = inlined_call_operand.vmem [shape: f32[1,64], index: 2, kind: input, shape index: {}]
  %s3 = inlined_call_operand.vmem [shape: bf16[64,32], index: 3, kind: input, shape index: {}]
  %s4 = inlined_call_operand.vmem [shape: f32[1,32], index: 4, kind: input, shape index: {}]
  %s5 = inlined_call_operand.hbm [shape: f32[16,32], index: 5, kind: output, shape index: {}]
  %s6 = sld [smem:[#allocation0]]
  $region38: #{tpu_custom_call.1} parent=0
    _
  %s8 = ssub.s32 1, %s6
  %s9 = scalar_select 0, %s8, %s6
  $region1: #{tpu_custom_call.1} parent=0
    #allocation3 [shape = 'u8[8192]{0}', space=vmem, size = 0x2000, scoped, tag = 'output window, operand 0, single buffered']
    #allocation4 [shape = 's32[1]{0}', space=sflag, size = 0x4, scoped, tag = 'scoped memory for tpu_custom_call.1']
    %10 = vsyncpa [#allocation4], 0
    // Predicated region
    $region2: #{tpu_custom_call.1} parent=1 // pred_check
      _
    $region3: #{tpu_custom_call.1} parent=1 // pred_check_branch
      %12 = sbr.rel (0) target = $region5
    $region4: #{tpu_custom_call.1} parent=1 // pred_region
      _
    $region5: #{tpu_custom_call.1} parent=1 // pred_fallthru
      _
    // Predicated region
    $region6: #{tpu_custom_call.1} parent=1 // pred_check
      _
    $region7: #{tpu_custom_call.1} parent=1 // pred_check_branch
      %14 = sbr.rel (0) target = $region9
    $region8: #{tpu_custom_call.1} parent=1 // pred_region
      _
    $region9: #{tpu_custom_call.1} parent=1 // pred_fallthru
      _
    // Predicated region
    $region10: #{tpu_custom_call.1} parent=1 // pred_check
      _
    $region11: #{tpu_custom_call.1} parent=1 // pred_check_branch
      %16 = sbr.rel (0) target = $region13
    $region12: #{tpu_custom_call.1} parent=1 // pred_region
      _
    $region13: #{tpu_custom_call.1} parent=1 // pred_fallthru
      _
    // Predicated region
    $region14: #{tpu_custom_call.1} parent=1 // pred_check
      _
    $region15: #{tpu_custom_call.1} parent=1 // pred_check_branch
      %18 = sbr.rel (0) target = $region17
    $region16: #{tpu_custom_call.1} parent=1 // pred_region
      _
    $region17: #{tpu_custom_call.1} parent=1 // pred_fallthru
      _
    // Predicated region
    $region18: #{tpu_custom_call.1} parent=1 // pred_check
      _
    $region19: #{tpu_custom_call.1} parent=1 // pred_check_branch
      %20 = sbr.rel (0) target = $region21
    $region20: #{tpu_custom_call.1} parent=1 // pred_region
      _
    $region21: #{tpu_custom_call.1} parent=1 // pred_fallthru
      _
    %p22 = scmp.eq.s32.totalorder 0, 0
    // Predicated region
    $region22: #{tpu_custom_call.1} parent=1 // pred_check
      %p23 = pneg %p22
    $region23: #{tpu_custom_call.1} parent=1 // pred_check_branch
      %25 = sbr.rel (%p23) target = $region25
    $region24: #{tpu_custom_call.1} parent=1 // pred_region
      %vm26 = vcmask 261120
      %27 = vst.msk [vmem:[#allocation2] sm:$0xff] %vm26, 0.0
      %28 = vst.msk [vmem:[#allocation2 + $0x8] sm:$0xff] %vm26, 0.0
    $region25: #{tpu_custom_call.1} parent=1 // pred_fallthru
      _
    %v29 = vld [vmem:[%s0] sm:$0xf]
    %v30 = vld [vmem:[%s0 + $0x4] sm:$0xf]
    %v31 = vld [vmem:[%s1] sm:$0xf]
    %v32 = vld [vmem:[%s1 + $0x4] sm:$0xf]
    %v33 = vld [vmem:[%s1 + $0x8] sm:$0xf]
    %v34 = vld [vmem:[%s1 + $0xc] sm:$0xf]
    %v35 = vld [vmem:[%s2] sm:$0x1]
    %v37 = vperm.slane %v35, 0
    %v41 = vunpack.c.l.b16 %v29
    %v42 = vunpack.c.l.b16 %v30
    %v43 = vpack.c.b16 %v42, %v41
    %v48 = vunpack.c.l.b16 %v31
    %v49 = vunpack.c.l.b16 %v32
    %v50 = vunpack.c.l.b16 %v33
    %v51 = vunpack.c.l.b16 %v34
    %v52 = vpack.c.b16 %v49, %v48
    %v53 = vpack.c.b16 %v51, %v50
    %vm56 = vcmask 261120
    %v58 = vsel %vm56, %v43, 0
    %60 = vmatpush.bf16.msra.mxu0 0
    %61 = vmatpush.bf16.msra.mxu0 0
    %62 = vmatpush.bf16.msra.mxu0 0
    %63 = vmatpush.bf16.msra.mxu0 0
    %64 = vmatpush.bf16.msra.mxu0 0
    %65 = vmatpush.bf16.msra.mxu0 0
    %66 = vmatpush.bf16.msra.mxu0 %v53
    %67 = vmatpush.bf16.msra.mxu0 %v52
    %68 = vmatmul.bf16.gmra.mxu0 %v58
    %v69 = vpop.f32.mrf.mxu0
    %v70 = vadd.f32 %v37, %v69
    %v71 = vpop.f32.mrf.mxu0
    %v72 = vadd.f32 %v37, %v71
    %73 = vdwg.mxu0
    %v74 = vmul.f32 %v70, 0.5
    %v75 = vmul.f32 %v72, 0.5
    %v76 = vmul.f32 %v70, 0.70710677
    %v77 = vmul.f32 %v72, 0.70710677
    %v78 = vmul.f32 %v76, %v76
    %v79 = vmin.f32 16.0, %v78
    %v80 = vmul.f32 %v79, 2.1237322e-06
    %v81 = vadd.f32 %v80, 0.00028619796
    %v82 = vmul.f32 %v79, %v81
    %v83 = vadd.f32 %v82, 0.0036580483
    %v84 = vmul.f32 %v79, %v83
    %v85 = vadd.f32 %v84, 0.05243302
    %v86 = vmul.f32 %v79, %v85
    %v87 = vadd.f32 %v86, 0.18741608
    %v88 = vmul.f32 %v79, %v87
    %v89 = vadd.f32 %v88, 1.1283791
    %v90 = vmul.f32 %v76, %v89
    %v91 = vmul.f32 %v79, 3.8918573e-05
    %v92 = vadd.f32 %v91, 0.001143296
    %v93 = vmul.f32 %v79, %v92
    %v94 = vadd.f32 %v93, 0.014752088
    %v95 = vmul.f32 %v79, %v94
    %v96 = vadd.f32 %v95, 0.112945676
    %v97 = vmul.f32 %v79, %v96
    %v98 = vadd.f32 %v97, 0.4994258
    %v99 = vmul.f32 %v79, %v98
    %v100 = vadd.f32 %v99, 1.0
    %v101 = vrcp.pop %v100
    %v102 = vmul.f32 %v100, %v101
    %v103 = vsub.f32 1.0, %v102
    %v104 = vmul.f32 %v101, %v103
    %v105 = vadd.f32 %v101, %v104
    %vm106 = vweird.f32 %v100
    %vm107 = vweird.f32 %v101
    %vm108 = vmor %vm106, %vm107
    %v109 = vsel %vm108, %v101, %v105
    %v110 = vand.u32 2147483647, %v100
    %vm111 = vcmp.eq.f32.partialorder %v110, 8.507059e+37
    %v112 = vand.u32 %v100, 2147483648
    %v113 = vor.u32 1.1754944e-38, %v112
    %v114 = vsel %vm111, %v113, %v109
    %v115 = vmul.f32 %v90, %v114
    %v116 = vmin.f32 %v115, 1.0
    %v117 = vmax.f32 %v116, -1.0
    %v118 = vmul.f32 %v77, %v77
    %v119 = vmin.f32 16.0, %v118
    %v120 = vmul.f32 %v119, 2.1237322e-06
    %v121 = vadd.f32 %v120, 0.00028619796
    %v122 = vmul.f32 %v119, %v121
    %v123 = vadd.f32 %v122, 0.0036580483
    %v124 = vmul.f32 %v119, %v123
    %v125 = vadd.f32 %v124, 0.05243302
    %v126 = vmul.f32 %v119, %v125
    %v127 = vadd.f32 %v126, 0.18741608
    %v128 = vmul.f32 %v119, %v127
    %v129 = vadd.f32 %v128, 1.1283791
    %v130 = vmul.f32 %v77, %v129
    %v131 = vmul.f32 %v119, 3.8918573e-05
    %v132 = vadd.f32 %v131, 0.001143296
    %v133 = vmul.f32 %v119, %v132
    %v134 = vadd.f32 %v133, 0.014752088
    %v135 = vmul.f32 %v119, %v134
    %v136 = vadd.f32 %v135, 0.112945676
    %v137 = vmul.f32 %v119, %v136
    %v138 = vadd.f32 %v137, 0.4994258
    %v139 = vmul.f32 %v119, %v138
    %v140 = vadd.f32 %v139, 1.0
    %v141 = vrcp.pop %v140
    %v142 = vmul.f32 %v140, %v141
    %v143 = vsub.f32 1.0, %v142
    %v144 = vmul.f32 %v141, %v143
    %v145 = vadd.f32 %v141, %v144
    %vm146 = vweird.f32 %v140
    %vm147 = vweird.f32 %v141
    %vm148 = vmor %vm146, %vm147
    %v149 = vsel %vm148, %v141, %v145
    %v150 = vand.u32 2147483647, %v140
    %vm151 = vcmp.eq.f32.partialorder %v150, 8.507059e+37
    %v152 = vand.u32 %v140, 2147483648
    %v153 = vor.u32 1.1754944e-38, %v152
    %v154 = vsel %vm151, %v153, %v149
    %v155 = vmul.f32 %v130, %v154
    %v156 = vmin.f32 %v155, 1.0
    %v157 = vmax.f32 %v156, -1.0
    %v158 = vadd.f32 %v117, 1.0
    %v159 = vadd.f32 %v157, 1.0
    %v160 = vmul.f32 %v74, %v158
    %v161 = vmul.f32 %v75, %v159
    %v162 = vld [vmem:[#allocation2] sm:$0xff]
    %v163 = vld [vmem:[#allocation2 + $0x8] sm:$0xff]
    %v164 = vpack.c.bf16 %v161, %v160
    %v165 = vld [vmem:[%s3] sm:$0xf]
    %v166 = vld [vmem:[%s3 + $0x4] sm:$0xf]
    %v167 = vld [vmem:[%s3 + $0x8] sm:$0xf]
    %v168 = vld [vmem:[%s3 + $0xc] sm:$0xf]
    %v169 = vld [vmem:[%s3 + $0x10] sm:$0xf]
    %v170 = vld [vmem:[%s3 + $0x14] sm:$0xf]
    %v171 = vld [vmem:[%s3 + $0x18] sm:$0xf]
    %v172 = vld [vmem:[%s3 + $0x1c] sm:$0xf]
    %v181 = vunpack.c.l.b16 %v165
    %v182 = vunpack.c.l.b16 %v166
    %v183 = vunpack.c.l.b16 %v167
    %v184 = vunpack.c.l.b16 %v168
    %v185 = vunpack.c.l.b16 %v169
    %v186 = vunpack.c.l.b16 %v170
    %v187 = vunpack.c.l.b16 %v171
    %v188 = vunpack.c.l.b16 %v172
    %v189 = vpack.c.b16 %v182, %v181
    %v190 = vpack.c.b16 %v184, %v183
    %v191 = vpack.c.b16 %v186, %v185
    %v192 = vpack.c.b16 %v188, %v187
    %vm197 = vcmask 523264
    %v199 = vsel %vm197, %v164, 0
    %201 = vmatpush.bf16.msra.mxu0 0
    %202 = vmatpush.bf16.msra.mxu0 0
    %203 = vmatpush.bf16.msra.mxu0 0
    %204 = vmatpush.bf16.msra.mxu0 0
    %205 = vmatpush.bf16.msra.mxu0 %v192
    %206 = vmatpush.bf16.msra.mxu0 %v191
    %207 = vmatpush.bf16.msra.mxu0 %v190
    %208 = vmatpush.bf16.msra.mxu0 %v189
    %209 = vmatmul.bf16.gmra.mxu0 %v199
    %v210 = vpop.f32.mrf.mxu0
    %v211 = vadd.f32 0.0, %v210
    %v212 = vpop.f32.mrf.mxu0
    %v213 = vadd.f32 0.0, %v212
    %214 = vdwg.mxu0
    %v215 = vadd.f32 %v162, %v211
    %v216 = vadd.f32 %v163, %v213
    %217 = vst.msk [vmem:[#allocation2] sm:$0xff] %vm56, %v215
    %218 = vst.msk [vmem:[#allocation2 + $0x8] sm:$0xff] %vm56, %v216
    // Predicated region
    $region26: #{tpu_custom_call.1} parent=1 // pred_check
      %p219 = pneg %p22
    $region27: #{tpu_custom_call.1} parent=1 // pred_check_branch
      %221 = sbr.rel (%p219) target = $region29
    $region28: #{tpu_custom_call.1} parent=1 // pred_region
      %v222 = vld [vmem:[#allocation2] sm:$0xff]
      %v223 = vld [vmem:[#allocation2 + $0x8] sm:$0xff]
      %v224 = vld [vmem:[%s4] sm:$0x1]
      %v226 = vperm.slane %v224, 0
      %v228 = vadd.f32 %v222, %v226
      %v229 = vadd.f32 %v223, %v226
      %230 = vst.msk [vmem:[#allocation3] sm:$0xff] %vm56, %v228
      %231 = vst.msk [vmem:[#allocation3 + $0x8] sm:$0xff] %vm56, %v229
    $region29: #{tpu_custom_call.1} parent=1 // pred_fallthru
      _
    // Predicated region
    $region30: #{tpu_custom_call.1} parent=1 // pred_check
      _
    $region31: #{tpu_custom_call.1} parent=1 // pred_check_branch
      %233 = sbr.rel (0) target = $region33
    $region32: #{tpu_custom_call.1} parent=1 // pred_region
      %235 = vsyncadd [#allocation4], 0
      %s236 = sshll.u32 [#allocation3], 4
      %s237 = int_to_ptr.vmem [resolvable:$true] %s236
      %s238 = sshll.u32 %s5, 4
      %s239 = int_to_ptr.hbm [resolvable:$true] %s238
      %244 = dma.vmem_to_hbm [thread:$0]  %s237, 256, %s239, [#allocation4], 128, 128, 8
    $region33: #{tpu_custom_call.1} parent=1 // pred_fallthru
      _
    // Predicated region
    $region34: #{tpu_custom_call.1} parent=1 // pred_check
      _
    $region35: #{tpu_custom_call.1} parent=1 // pred_check_branch
      %246 = sbr.rel (0) target = $region37
    $region36: #{tpu_custom_call.1} parent=1 // pred_region
      %248 = dma.done [#allocation4], 256
    $region37: #{tpu_custom_call.1} parent=1 // pred_fallthru
      _
    %249 = vsyncpa [#allocation4], 1

</llo_original>
